<compile_context>
chip_gen: v5e
topology: v5e:2x2
jax: 0.10.0
libtpu: 0.0.40
codegen_flags: <defaults>
</compile_context>

<pallas_src>
import functools

import jax
import jax.numpy as jnp
from jax.experimental import pallas as pl
from jax.experimental.pallas import tpu as pltpu


_VMEM_LIMIT_BYTES = 32 * 1024 * 1024   # safe scoped-VMEM target on v5e/v6e/v7x
_MAX_TILE_ROWS = 64                    # 64 rows * 128 lanes = 8192 pixels / block


def _choose_tile_rows(n_classes, score_itemsize, n_rows):
    """Rows (of 128 pixels each) per block.

    Rows map to the sublane axis, so blocks are fully packed for any class
    count.  The VMEM model covers the double-buffered score + int32 target
    input blocks plus ~5 live f32 temporaries per class in the kernel body.
    """
    if n_rows <= 8:
        return n_rows                          # block == full (small) row extent
    per_row = 128 * (
        2 * (n_classes * score_itemsize + 4)   # double-buffered score + target
        + 5 * n_classes * 4)                   # live f32 temporaries in the body
    budget = _VMEM_LIMIT_BYTES // 2            # leave half as headroom
    rows = 8
    while (rows * 2 <= _MAX_TILE_ROWS
           and (rows * 2) * per_row <= budget
           and rows * 2 <= n_rows):
        rows *= 2
    return rows


def _choose_parallel_split(batch, num_chunks):
    """Make the product of the parallel grid axes even (feeds both v7x TCs)."""
    if batch % 2 == 0 or num_chunks < 2:
        return 1
    return 2


def _dice_sums_kernel(x_ref, t_ref, inter_ref, ysum_ref, zsum_ref, *,
                      n_classes, hw, tile_rows, acc_rows, chunks_per_split,
                      apply_softmax, need_mask):
    """Accumulates per-class partial sums for one (batch, split, chunk) block.

    x_ref:  (1, C, tile_rows, 128) scores  -- pixels packed (sublane, lane)
    t_ref:  (1, 1, tile_rows, 128) int32 labels
    outputs (resident across the chunk axis): (1, 1, C, acc_rows, 128) f32
        inter = sum(score * onehot)
        ysum  = sum(onehot)            (onehot^2 == onehot)
        zsum  = sum(score * score)
    """
    j = pl.program_id(2)

    @pl.when(j == 0)
    def _():
        inter_ref[...] = jnp.zeros_like(inter_ref)
        ysum_ref[...] = jnp.zeros_like(ysum_ref)
        zsum_ref[...] = jnp.zeros_like(zsum_ref)

    t = t_ref[0, 0]                                     # (tile_rows, 128) int32

    valid = None
    if need_mask:
        # Per-pixel validity (shared by every class): global flat pixel index.
        chunk = pl.program_id(1) * chunks_per_split + j
        base = chunk * (tile_rows * 128)
        rows = jax.lax.broadcasted_iota(jnp.int32, (tile_rows, 128), 0)
        lanes = jax.lax.broadcasted_iota(jnp.int32, (tile_rows, 128), 1)
        valid = (base + rows * 128 + lanes) < hw
        # Kill the one-hot in the tail; inter / ysum then need no further mask.
        t = jnp.where(valid, t, n_classes)

    # Per-class pixel slabs, upcast to f32 in-kernel (inputs may be bf16).
    xs = [x_ref[0, i].astype(jnp.float32) for i in range(n_classes)]

    if apply_softmax:
        # Class-axis max / sum as elementwise VPU ops over per-class slabs
        # (no cross-sublane XLU reduce); exp goes to the EUP.
        m = xs[0]
        for i in range(1, n_classes):
            m = jnp.maximum(m, xs[i])
        es = [jnp.exp(x - m) for x in xs]
        denom = es[0]
        for i in range(1, n_classes):
            denom = denom + es[i]
        inv = 1.0 / denom                               # exact divide (accuracy)
        xs = [e * inv for e in es]
        if need_mask:
            xs = [jnp.where(valid, x, 0.0) for x in xs]
    elif need_mask:
        xs = [jnp.where(valid, x, 0.0) for x in xs]     # tail must not feed zsum

    def fold(v):
        # (tile_rows, 128) -> (acc_rows, 128) via sublane-halving adds (pure VPU).
        r = v.shape[0]
        while r > acc_rows:
            h = r // 2
            v = v[:h] + v[h:]
            r = h
        return v

    for i in range(n_classes):
        onehot = t == i                                 # bool, no cast
        xi = xs[i]
        inter_ref[0, 0, i] += fold(jnp.where(onehot, xi, 0.0))
        ysum_ref[0, 0, i] += fold(jnp.where(onehot, 1.0, 0.0))
        zsum_ref[0, 0, i] += fold(xi * xi)


def _dice_class_sums(score, tgt, *, hw, tile_rows, p_split, apply_softmax):
    """score: (B, C, R, 128) float; tgt: (B, 1, R, 128) int32 -> three (C,) sums."""
    B, C, R, _ = score.shape
    acc_rows = min(8, tile_rows)
    num_chunks = pl.cdiv(R, tile_rows)
    chunks_per_split = pl.cdiv(num_chunks, p_split)
    covered = p_split * chunks_per_split * tile_rows * 128
    need_mask = covered != hw
    last_block = num_chunks - 1

    def pix_map(b, p, j):
        # Clamp so over-split / tail (p, j) steps re-read the last valid block;
        # their contribution is zeroed by the in-kernel validity mask.
        return (b, 0, jnp.minimum(p * chunks_per_split + j, last_block), 0)

    def acc_map(b, p, j):
        return (b, p, 0, 0, 0)

    kernel = functools.partial(
        _dice_sums_kernel, n_classes=C, hw=hw, tile_rows=tile_rows,
        acc_rows=acc_rows, chunks_per_split=chunks_per_split,
        apply_softmax=apply_softmax, need_mask=need_mask)

    out_shape = jax.ShapeDtypeStruct((B, p_split, C, acc_rows, 128), jnp.float32)
    acc_spec = pl.BlockSpec((1, 1, C, acc_rows, 128), acc_map)

    inter, ysum, zsum = pl.pallas_call(
        kernel,
        out_shape=(out_shape, out_shape, out_shape),
        grid_spec=pltpu.PrefetchScalarGridSpec(
            num_scalar_prefetch=0,
            grid=(B, p_split, chunks_per_split),
            in_specs=[
                pl.BlockSpec((1, C, tile_rows, 128), pix_map),
                pl.BlockSpec((1, 1, tile_rows, 128), pix_map),
            ],
            out_specs=[acc_spec, acc_spec, acc_spec],
        ),
        compiler_params=pltpu.CompilerParams(
            dimension_semantics=("parallel", "parallel", "arbitrary"),
            vmem_limit_bytes=_VMEM_LIMIT_BYTES),
    )(score, tgt)

    # Tiny final reduction over batch, split, sublane partials and lanes.
    return (inter.sum(axis=(0, 1, 3, 4)),
            ysum.sum(axis=(0, 1, 3, 4)),
            zsum.sum(axis=(0, 1, 3, 4)))


class DiceLoss:
    """JAX/Pallas port of the PyTorch DiceLoss module (forward only)."""

    def __init__(self, n_classes):
        self.n_classes = n_classes

    def __call__(self, inputs, target, weight=None, softmax=False):
        # inputs: (B, C, H, W) float scores; target: (B, H, W) int class labels
        B, C, H, W = inputs.shape
        assert C == self.n_classes
        assert target.shape == (B, H, W)
        if weight is None:
            weight = [1.0] * self.n_classes
        weight = jnp.asarray(weight, jnp.float32)

        HW = H * W
        score = inputs.reshape(B, C, HW)                # keep native dtype
        tgt = target.reshape(B, 1, HW).astype(jnp.int32)

        # Pack pixels into full (sublane=rows, lane=128) tiles so small class
        # counts never under-fill vregs.  Reshape is free when HW % 128 == 0
        # (the common case); otherwise one pad pass (score -> 0, label ->
        # n_classes so the one-hot vanishes in the pad).
        hw_pad = ((HW + 127) // 128) * 128
        if hw_pad != HW:
            score = jnp.pad(score, ((0, 0), (0, 0), (0, hw_pad - HW)))
            tgt = jnp.pad(tgt, ((0, 0), (0, 0), (0, hw_pad - HW)),
                          constant_values=self.n_classes)
        R = hw_pad // 128
        score = score.reshape(B, C, R, 128)
        tgt = tgt.reshape(B, 1, R, 128)

        tile_rows = _choose_tile_rows(C, jnp.dtype(score.dtype).itemsize, R)
        num_chunks = pl.cdiv(R, tile_rows)
        p_split = _choose_parallel_split(B, num_chunks)

        inter, ysum, zsum = _dice_class_sums(
            score, tgt, hw=HW, tile_rows=tile_rows, p_split=p_split,
            apply_softmax=softmax)

        smooth = 1e-05
        dice = 1.0 - (2.0 * inter + smooth) / (zsum + ysum + smooth)  # per class
        # classes 1 .. n_classes-1 only, weighted, divided by n_classes
        cls_mask = (jnp.arange(self.n_classes) >= 1).astype(jnp.float32)
        return jnp.sum(dice * weight * cls_mask) / self.n_classes
        # TODO(synk): the PyTorch module also builds a host-side
        # `class_wise_dice` Python list via .item(); only the returned loss is
        # reproduced here.


def _reference_dice_loss(inputs, target, n_classes, weight=None, softmax=False):
    """Pure-JAX reference mirroring the PyTorch module exactly."""
    if softmax:
        inputs = jax.nn.softmax(inputs, axis=1)
    if weight is None:
        weight = [1.0] * n_classes
    onehot = (target[:, None, :, :] ==
              jnp.arange(n_classes)[None, :, None, None]).astype(jnp.float32)
    smooth = 1e-05
    loss = 0.0
    for i in range(1, n_classes):
        s = inputs[:, i].astype(jnp.float32)
        t = onehot[:, i]
        intersect = jnp.sum(s * t)
        y_sum = jnp.sum(t * t)
        z_sum = jnp.sum(s * s)
        dice = 1.0 - (2 * intersect + smooth) / (z_sum + y_sum + smooth)
        loss = loss + dice * weight[i]
    return loss / n_classes


def _check(B, C, H, W, softmax, key):
    k1, k2 = jax.random.split(key)
    inputs = jax.random.uniform(k1, (B, C, H, W), jnp.float32)
    target = jax.random.randint(k2, (B, H, W), 0, C, jnp.int32)
    loss = jax.block_until_ready(DiceLoss(C)(inputs, target, softmax=softmax))
    ref = jax.block_until_ready(
        _reference_dice_loss(inputs, target, C, softmax=softmax))
    assert jnp.allclose(loss, ref, rtol=1e-5, atol=1e-6), \
        (B, C, H, W, softmax, loss, ref)


if __name__ == "__main__":
    keys = jax.random.split(jax.random.PRNGKey(0), 5)
    # main shape: tile-aligned, even batch (batch is the parallel axis)
    _check(2, 4, 16, 16, False, keys[0])
    _check(2, 4, 16, 16, True, keys[1])
    # non-128-aligned pixel count: exercises the host pad + in-kernel tail mask
    _check(2, 4, 20, 20, False, keys[2])
    _check(2, 4, 20, 20, True, keys[3])
    # B == 1: exercises the pixel-chunk parallel split (keeps both v7x TCs busy)
    _check(1, 4, 128, 128, False, keys[4])
    print("KERNEL_OK")
</pallas_src>

<mosaic_0001>
module attributes {stable_mosaic.version = 11 : i64} {
  func.func @_dice_sums_kernel(%arg0: i32, %arg1: i32, %arg2: i32, %arg3: memref<1x4x2x128xf32, #tpu.memory_space<vmem>>, %arg4: memref<1x1x2x128xi32, #tpu.memory_space<vmem>>, %arg5: memref<1x1x4x2x128xf32, #tpu.memory_space<vmem>>, %arg6: memref<1x1x4x2x128xf32, #tpu.memory_space<vmem>>, %arg7: memref<1x1x4x2x128xf32, #tpu.memory_space<vmem>>) attributes {dimension_semantics = [#tpu.dimension_semantics<parallel>, #tpu.dimension_semantics<parallel>, #tpu.dimension_semantics<arbitrary>], iteration_bounds = array<i64: 2, 1, 1>, scalar_prefetch = 0 : i64, scratch_operands = 0 : i64, tpu.core_type = #tpu.core_type<tc>, window_params = [{transform_indices = @transform_0, window_bounds = array<i64: 1, 4, 2, 128>}, {transform_indices = @transform_1, window_bounds = array<i64: 1, 1, 2, 128>}, {transform_indices = @transform_2, window_bounds = array<i64: 1, 1, 4, 2, 128>}, {transform_indices = @transform_3, window_bounds = array<i64: 1, 1, 4, 2, 128>}, {transform_indices = @transform_4, window_bounds = array<i64: 1, 1, 4, 2, 128>}]} {
    %c0_i32 = arith.constant 0 : i32
    %0 = arith.cmpi eq, %arg2, %c0_i32 : i32
    %1 = arith.extui %0 : i1 to i32
    %c0_i32_0 = arith.constant 0 : i32
    %2 = arith.cmpi ne, %1, %c0_i32_0 : i32
    scf.if %2 {
      %cst_149 = arith.constant 0.000000e+00 : f32
      %117 = vector.broadcast %cst_149 : f32 to vector<1x1x4x2x128xf32>
      %c0_150 = arith.constant 0 : index
      %c0_151 = arith.constant 0 : index
      %c0_152 = arith.constant 0 : index
      %c0_153 = arith.constant 0 : index
      %c0_154 = arith.constant 0 : index
      %118 = vector.load %arg5[%c0_150, %c0_151, %c0_152, %c0_153, %c0_154] : memref<1x1x4x2x128xf32, #tpu.memory_space<vmem>>, vector<1x1x4x2x128xf32>
      tpu.vector_store %arg5[%c0_150, %c0_151, %c0_152, %c0_153, %c0_154], %117 {strides = array<i32>} : memref<1x1x4x2x128xf32, #tpu.memory_space<vmem>>, vector<1x1x4x2x128xf32>,
      %cst_155 = arith.constant 0.000000e+00 : f32
      %119 = vector.broadcast %cst_155 : f32 to vector<1x1x4x2x128xf32>
      %c0_156 = arith.constant 0 : index
      %c0_157 = arith.constant 0 : index
      %c0_158 = arith.constant 0 : index
      %c0_159 = arith.constant 0 : index
      %c0_160 = arith.constant 0 : index
      %120 = vector.load %arg6[%c0_156, %c0_157, %c0_158, %c0_159, %c0_160] : memref<1x1x4x2x128xf32, #tpu.memory_space<vmem>>, vector<1x1x4x2x128xf32>
      tpu.vector_store %arg6[%c0_156, %c0_157, %c0_158, %c0_159, %c0_160], %119 {strides = array<i32>} : memref<1x1x4x2x128xf32, #tpu.memory_space<vmem>>, vector<1x1x4x2x128xf32>,
      %cst_161 = arith.constant 0.000000e+00 : f32
      %121 = vector.broadcast %cst_161 : f32 to vector<1x1x4x2x128xf32>
      %c0_162 = arith.constant 0 : index
      %c0_163 = arith.constant 0 : index
      %c0_164 = arith.constant 0 : index
      %c0_165 = arith.constant 0 : index
      %c0_166 = arith.constant 0 : index
      %122 = vector.load %arg7[%c0_162, %c0_163, %c0_164, %c0_165, %c0_166] : memref<1x1x4x2x128xf32, #tpu.memory_space<vmem>>, vector<1x1x4x2x128xf32>
      tpu.vector_store %arg7[%c0_162, %c0_163, %c0_164, %c0_165, %c0_166], %121 {strides = array<i32>} : memref<1x1x4x2x128xf32, #tpu.memory_space<vmem>>, vector<1x1x4x2x128xf32>,
    } else {
    }
    %c0 = arith.constant 0 : index
    %c0_1 = arith.constant 0 : index
    %c0_2 = arith.constant 0 : index
    %c0_3 = arith.constant 0 : index
    %3 = vector.load %arg4[%c0, %c0_1, %c0_2, %c0_3] : memref<1x1x2x128xi32, #tpu.memory_space<vmem>>, vector<1x1x2x128xi32>
    %4 = vector.shape_cast %3 : vector<1x1x2x128xi32> to vector<2x128xi32>
    %c0_4 = arith.constant 0 : index
    %c0_5 = arith.constant 0 : index
    %c0_6 = arith.constant 0 : index
    %c0_7 = arith.constant 0 : index
    %5 = vector.load %arg3[%c0_4, %c0_5, %c0_6, %c0_7] : memref<1x4x2x128xf32, #tpu.memory_space<vmem>>, vector<1x1x2x128xf32>
    %6 = vector.shape_cast %5 : vector<1x1x2x128xf32> to vector<2x128xf32>
    %c0_8 = arith.constant 0 : index
    %c1 = arith.constant 1 : index
    %c0_9 = arith.constant 0 : index
    %c0_10 = arith.constant 0 : index
    %7 = vector.load %arg3[%c0_8, %c1, %c0_9, %c0_10] : memref<1x4x2x128xf32, #tpu.memory_space<vmem>>, vector<1x1x2x128xf32>
    %8 = vector.shape_cast %7 : vector<1x1x2x128xf32> to vector<2x128xf32>
    %c0_11 = arith.constant 0 : index
    %c2 = arith.constant 2 : index
    %c0_12 = arith.constant 0 : index
    %c0_13 = arith.constant 0 : index
    %9 = vector.load %arg3[%c0_11, %c2, %c0_12, %c0_13] : memref<1x4x2x128xf32, #tpu.memory_space<vmem>>, vector<1x1x2x128xf32>
    %10 = vector.shape_cast %9 : vector<1x1x2x128xf32> to vector<2x128xf32>
    %c0_14 = arith.constant 0 : index
    %c3 = arith.constant 3 : index
    %c0_15 = arith.constant 0 : index
    %c0_16 = arith.constant 0 : index
    %11 = vector.load %arg3[%c0_14, %c3, %c0_15, %c0_16] : memref<1x4x2x128xf32, #tpu.memory_space<vmem>>, vector<1x1x2x128xf32>
    %12 = vector.shape_cast %11 : vector<1x1x2x128xf32> to vector<2x128xf32>
    %c0_i32_17 = arith.constant 0 : i32
    %13 = vector.broadcast %c0_i32_17 : i32 to vector<2x128xi32>
    %14 = arith.cmpi eq, %4, %13 : vector<2x128xi32>
    %c0_18 = arith.constant 0 : index
    %c0_19 = arith.constant 0 : index
    %c0_20 = arith.constant 0 : index
    %c0_21 = arith.constant 0 : index
    %c0_22 = arith.constant 0 : index
    %15 = vector.load %arg5[%c0_18, %c0_19, %c0_20, %c0_21, %c0_22] : memref<1x1x4x2x128xf32, #tpu.memory_space<vmem>>, vector<1x1x1x2x128xf32>
    %16 = vector.shape_cast %15 : vector<1x1x1x2x128xf32> to vector<2x128xf32>
    %cst = arith.constant 0.000000e+00 : f32
    %17 = vector.broadcast %cst : f32 to vector<2x128xf32>
    %18 = arith.select %14, %6, %17 : vector<2x128xi1>, vector<2x128xf32>
    %19 = arith.addf %16, %18 : vector<2x128xf32>
    %c0_23 = arith.constant 0 : index
    %c0_24 = arith.constant 0 : index
    %c0_25 = arith.constant 0 : index
    %c0_26 = arith.constant 0 : index
    %c0_27 = arith.constant 0 : index
    %20 = vector.load %arg5[%c0_23, %c0_24, %c0_25, %c0_26, %c0_27] : memref<1x1x4x2x128xf32, #tpu.memory_space<vmem>>, vector<1x1x1x2x128xf32>
    %21 = vector.shape_cast %20 : vector<1x1x1x2x128xf32> to vector<2x128xf32>
    %22 = vector.shape_cast %19 : vector<2x128xf32> to vector<1x1x1x2x128xf32>
    tpu.vector_store %arg5[%c0_23, %c0_24, %c0_25, %c0_26, %c0_27], %22 {strides = array<i32>} : memref<1x1x4x2x128xf32, #tpu.memory_space<vmem>>, vector<1x1x1x2x128xf32>,
    %c0_28 = arith.constant 0 : index
    %c0_29 = arith.constant 0 : index
    %c0_30 = arith.constant 0 : index
    %c0_31 = arith.constant 0 : index
    %c0_32 = arith.constant 0 : index
    %23 = vector.load %arg6[%c0_28, %c0_29, %c0_30, %c0_31, %c0_32] : memref<1x1x4x2x128xf32, #tpu.memory_space<vmem>>, vector<1x1x1x2x128xf32>
    %24 = vector.shape_cast %23 : vector<1x1x1x2x128xf32> to vector<2x128xf32>
    %cst_33 = arith.constant 1.000000e+00 : f32
    %cst_34 = arith.constant 0.000000e+00 : f32
    %25 = vector.broadcast %cst_33 : f32 to vector<2x128xf32>
    %26 = vector.broadcast %cst_34 : f32 to vector<2x128xf32>
    %27 = arith.select %14, %25, %26 : vector<2x128xi1>, vector<2x128xf32>
    %28 = arith.addf %24, %27 : vector<2x128xf32>
    %c0_35 = arith.constant 0 : index
    %c0_36 = arith.constant 0 : index
    %c0_37 = arith.constant 0 : index
    %c0_38 = arith.constant 0 : index
    %c0_39 = arith.constant 0 : index
    %29 = vector.load %arg6[%c0_35, %c0_36, %c0_37, %c0_38, %c0_39] : memref<1x1x4x2x128xf32, #tpu.memory_space<vmem>>, vector<1x1x1x2x128xf32>
    %30 = vector.shape_cast %29 : vector<1x1x1x2x128xf32> to vector<2x128xf32>
    %31 = vector.shape_cast %28 : vector<2x128xf32> to vector<1x1x1x2x128xf32>
    tpu.vector_store %arg6[%c0_35, %c0_36, %c0_37, %c0_38, %c0_39], %31 {strides = array<i32>} : memref<1x1x4x2x128xf32, #tpu.memory_space<vmem>>, vector<1x1x1x2x128xf32>,
    %c0_40 = arith.constant 0 : index
    %c0_41 = arith.constant 0 : index
    %c0_42 = arith.constant 0 : index
    %c0_43 = arith.constant 0 : index
    %c0_44 = arith.constant 0 : index
    %32 = vector.load %arg7[%c0_40, %c0_41, %c0_42, %c0_43, %c0_44] : memref<1x1x4x2x128xf32, #tpu.memory_space<vmem>>, vector<1x1x1x2x128xf32>
    %33 = vector.shape_cast %32 : vector<1x1x1x2x128xf32> to vector<2x128xf32>
    %34 = arith.mulf %6, %6 : vector<2x128xf32>
    %35 = arith.addf %33, %34 : vector<2x128xf32>
    %c0_45 = arith.constant 0 : index
    %c0_46 = arith.constant 0 : index
    %c0_47 = arith.constant 0 : index
    %c0_48 = arith.constant 0 : index
    %c0_49 = arith.constant 0 : index
    %36 = vector.load %arg7[%c0_45, %c0_46, %c0_47, %c0_48, %c0_49] : memref<1x1x4x2x128xf32, #tpu.memory_space<vmem>>, vector<1x1x1x2x128xf32>
    %37 = vector.shape_cast %36 : vector<1x1x1x2x128xf32> to vector<2x128xf32>
    %38 = vector.shape_cast %35 : vector<2x128xf32> to vector<1x1x1x2x128xf32>
    tpu.vector_store %arg7[%c0_45, %c0_46, %c0_47, %c0_48, %c0_49], %38 {strides = array<i32>} : memref<1x1x4x2x128xf32, #tpu.memory_space<vmem>>, vector<1x1x1x2x128xf32>,
    %c1_i32 = arith.constant 1 : i32
    %39 = vector.broadcast %c1_i32 : i32 to vector<2x128xi32>
    %40 = arith.cmpi eq, %4, %39 : vector<2x128xi32>
    %c0_50 = arith.constant 0 : index
    %c0_51 = arith.constant 0 : index
    %c1_52 = arith.constant 1 : index
    %c0_53 = arith.constant 0 : index
    %c0_54 = arith.constant 0 : index
    %41 = vector.load %arg5[%c0_50, %c0_51, %c1_52, %c0_53, %c0_54] : memref<1x1x4x2x128xf32, #tpu.memory_space<vmem>>, vector<1x1x1x2x128xf32>
    %42 = vector.shape_cast %41 : vector<1x1x1x2x128xf32> to vector<2x128xf32>
    %cst_55 = arith.constant 0.000000e+00 : f32
    %43 = vector.broadcast %cst_55 : f32 to vector<2x128xf32>
    %44 = arith.select %40, %8, %43 : vector<2x128xi1>, vector<2x128xf32>
    %45 = arith.addf %42, %44 : vector<2x128xf32>
    %c0_56 = arith.constant 0 : index
    %c0_57 = arith.constant 0 : index
    %c1_58 = arith.constant 1 : index
    %c0_59 = arith.constant 0 : index
    %c0_60 = arith.constant 0 : index
    %46 = vector.load %arg5[%c0_56, %c0_57, %c1_58, %c0_59, %c0_60] : memref<1x1x4x2x128xf32, #tpu.memory_space<vmem>>, vector<1x1x1x2x128xf32>
    %47 = vector.shape_cast %46 : vector<1x1x1x2x128xf32> to vector<2x128xf32>
    %48 = vector.shape_cast %45 : vector<2x128xf32> to vector<1x1x1x2x128xf32>
    tpu.vector_store %arg5[%c0_56, %c0_57, %c1_58, %c0_59, %c0_60], %48 {strides = array<i32>} : memref<1x1x4x2x128xf32, #tpu.memory_space<vmem>>, vector<1x1x1x2x128xf32>,
    %c0_61 = arith.constant 0 : index
    %c0_62 = arith.constant 0 : index
    %c1_63 = arith.constant 1 : index
    %c0_64 = arith.constant 0 : index
    %c0_65 = arith.constant 0 : index
    %49 = vector.load %arg6[%c0_61, %c0_62, %c1_63, %c0_64, %c0_65] : memref<1x1x4x2x128xf32, #tpu.memory_space<vmem>>, vector<1x1x1x2x128xf32>
    %50 = vector.shape_cast %49 : vector<1x1x1x2x128xf32> to vector<2x128xf32>
    %cst_66 = arith.constant 1.000000e+00 : f32
    %cst_67 = arith.constant 0.000000e+00 : f32
    %51 = vector.broadcast %cst_66 : f32 to vector<2x128xf32>
    %52 = vector.broadcast %cst_67 : f32 to vector<2x128xf32>
    %53 = arith.select %40, %51, %52 : vector<2x128xi1>, vector<2x128xf32>
    %54 = arith.addf %50, %53 : vector<2x128xf32>
    %c0_68 = arith.constant 0 : index
    %c0_69 = arith.constant 0 : index
    %c1_70 = arith.constant 1 : index
    %c0_71 = arith.constant 0 : index
    %c0_72 = arith.constant 0 : index
    %55 = vector.load %arg6[%c0_68, %c0_69, %c1_70, %c0_71, %c0_72] : memref<1x1x4x2x128xf32, #tpu.memory_space<vmem>>, vector<1x1x1x2x128xf32>
    %56 = vector.shape_cast %55 : vector<1x1x1x2x128xf32> to vector<2x128xf32>
    %57 = vector.shape_cast %54 : vector<2x128xf32> to vector<1x1x1x2x128xf32>
    tpu.vector_store %arg6[%c0_68, %c0_69, %c1_70, %c0_71, %c0_72], %57 {strides = array<i32>} : memref<1x1x4x2x128xf32, #tpu.memory_space<vmem>>, vector<1x1x1x2x128xf32>,
    %c0_73 = arith.constant 0 : index
    %c0_74 = arith.constant 0 : index
    %c1_75 = arith.constant 1 : index
    %c0_76 = arith.constant 0 : index
    %c0_77 = arith.constant 0 : index
    %58 = vector.load %arg7[%c0_73, %c0_74, %c1_75, %c0_76, %c0_77] : memref<1x1x4x2x128xf32, #tpu.memory_space<vmem>>, vector<1x1x1x2x128xf32>
    %59 = vector.shape_cast %58 : vector<1x1x1x2x128xf32> to vector<2x128xf32>
    %60 = arith.mulf %8, %8 : vector<2x128xf32>
    %61 = arith.addf %59, %60 : vector<2x128xf32>
    %c0_78 = arith.constant 0 : index
    %c0_79 = arith.constant 0 : index
    %c1_80 = arith.constant 1 : index
    %c0_81 = arith.constant 0 : index
    %c0_82 = arith.constant 0 : index
    %62 = vector.load %arg7[%c0_78, %c0_79, %c1_80, %c0_81, %c0_82] : memref<1x1x4x2x128xf32, #tpu.memory_space<vmem>>, vector<1x1x1x2x128xf32>
    %63 = vector.shape_cast %62 : vector<1x1x1x2x128xf32> to vector<2x128xf32>
    %64 = vector.shape_cast %61 : vector<2x128xf32> to vector<1x1x1x2x128xf32>
    tpu.vector_store %arg7[%c0_78, %c0_79, %c1_80, %c0_81, %c0_82], %64 {strides = array<i32>} : memref<1x1x4x2x128xf32, #tpu.memory_space<vmem>>, vector<1x1x1x2x128xf32>,
    %c2_i32 = arith.constant 2 : i32
    %65 = vector.broadcast %c2_i32 : i32 to vector<2x128xi32>
    %66 = arith.cmpi eq, %4, %65 : vector<2x128xi32>
    %c0_83 = arith.constant 0 : index
    %c0_84 = arith.constant 0 : index
    %c2_85 = arith.constant 2 : index
    %c0_86 = arith.constant 0 : index
    %c0_87 = arith.constant 0 : index
    %67 = vector.load %arg5[%c0_83, %c0_84, %c2_85, %c0_86, %c0_87] : memref<1x1x4x2x128xf32, #tpu.memory_space<vmem>>, vector<1x1x1x2x128xf32>
    %68 = vector.shape_cast %67 : vector<1x1x1x2x128xf32> to vector<2x128xf32>
    %cst_88 = arith.constant 0.000000e+00 : f32
    %69 = vector.broadcast %cst_88 : f32 to vector<2x128xf32>
    %70 = arith.select %66, %10, %69 : vector<2x128xi1>, vector<2x128xf32>
    %71 = arith.addf %68, %70 : vector<2x128xf32>
    %c0_89 = arith.constant 0 : index
    %c0_90 = arith.constant 0 : index
    %c2_91 = arith.constant 2 : index
    %c0_92 = arith.constant 0 : index
    %c0_93 = arith.constant 0 : index
    %72 = vector.load %arg5[%c0_89, %c0_90, %c2_91, %c0_92, %c0_93] : memref<1x1x4x2x128xf32, #tpu.memory_space<vmem>>, vector<1x1x1x2x128xf32>
    %73 = vector.shape_cast %72 : vector<1x1x1x2x128xf32> to vector<2x128xf32>
    %74 = vector.shape_cast %71 : vector<2x128xf32> to vector<1x1x1x2x128xf32>
    tpu.vector_store %arg5[%c0_89, %c0_90, %c2_91, %c0_92, %c0_93], %74 {strides = array<i32>} : memref<1x1x4x2x128xf32, #tpu.memory_space<vmem>>, vector<1x1x1x2x128xf32>,
    %c0_94 = arith.constant 0 : index
    %c0_95 = arith.constant 0 : index
    %c2_96 = arith.constant 2 : index
    %c0_97 = arith.constant 0 : index
    %c0_98 = arith.constant 0 : index
    %75 = vector.load %arg6[%c0_94, %c0_95, %c2_96, %c0_97, %c0_98] : memref<1x1x4x2x128xf32, #tpu.memory_space<vmem>>, vector<1x1x1x2x128xf32>
    %76 = vector.shape_cast %75 : vector<1x1x1x2x128xf32> to vector<2x128xf32>
    %cst_99 = arith.constant 1.000000e+00 : f32
    %cst_100 = arith.constant 0.000000e+00 : f32
    %77 = vector.broadcast %cst_99 : f32 to vector<2x128xf32>
    %78 = vector.broadcast %cst_100 : f32 to vector<2x128xf32>
    %79 = arith.select %66, %77, %78 : vector<2x128xi1>, vector<2x128xf32>
    %80 = arith.addf %76, %79 : vector<2x128xf32>
    %c0_101 = arith.constant 0 : index
    %c0_102 = arith.constant 0 : index
    %c2_103 = arith.constant 2 : index
    %c0_104 = arith.constant 0 : index
    %c0_105 = arith.constant 0 : index
    %81 = vector.load %arg6[%c0_101, %c0_102, %c2_103, %c0_104, %c0_105] : memref<1x1x4x2x128xf32, #tpu.memory_space<vmem>>, vector<1x1x1x2x128xf32>
    %82 = vector.shape_cast %81 : vector<1x1x1x2x128xf32> to vector<2x128xf32>
    %83 = vector.shape_cast %80 : vector<2x128xf32> to vector<1x1x1x2x128xf32>
    tpu.vector_store %arg6[%c0_101, %c0_102, %c2_103, %c0_104, %c0_105], %83 {strides = array<i32>} : memref<1x1x4x2x128xf32, #tpu.memory_space<vmem>>, vector<1x1x1x2x128xf32>,
    %c0_106 = arith.constant 0 : index
    %c0_107 = arith.constant 0 : index
    %c2_108 = arith.constant 2 : index
    %c0_109 = arith.constant 0 : index
    %c0_110 = arith.constant 0 : index
    %84 = vector.load %arg7[%c0_106, %c0_107, %c2_108, %c0_109, %c0_110] : memref<1x1x4x2x128xf32, #tpu.memory_space<vmem>>, vector<1x1x1x2x128xf32>
    %85 = vector.shape_cast %84 : vector<1x1x1x2x128xf32> to vector<2x128xf32>
    %86 = arith.mulf %10, %10 : vector<2x128xf32>
    %87 = arith.addf %85, %86 : vector<2x128xf32>
    %c0_111 = arith.constant 0 : index
    %c0_112 = arith.constant 0 : index
    %c2_113 = arith.constant 2 : index
    %c0_114 = arith.constant 0 : index
    %c0_115 = arith.constant 0 : index
    %88 = vector.load %arg7[%c0_111, %c0_112, %c2_113, %c0_114, %c0_115] : memref<1x1x4x2x128xf32, #tpu.memory_space<vmem>>, vector<1x1x1x2x128xf32>
    %89 = vector.shape_cast %88 : vector<1x1x1x2x128xf32> to vector<2x128xf32>
    %90 = vector.shape_cast %87 : vector<2x128xf32> to vector<1x1x1x2x128xf32>
    tpu.vector_store %arg7[%c0_111, %c0_112, %c2_113, %c0_114, %c0_115], %90 {strides = array<i32>} : memref<1x1x4x2x128xf32, #tpu.memory_space<vmem>>, vector<1x1x1x2x128xf32>,
    %c3_i32 = arith.constant 3 : i32
    %91 = vector.broadcast %c3_i32 : i32 to vector<2x128xi32>
    %92 = arith.cmpi eq, %4, %91 : vector<2x128xi32>
    %c0_116 = arith.constant 0 : index
    %c0_117 = arith.constant 0 : index
    %c3_118 = arith.constant 3 : index
    %c0_119 = arith.constant 0 : index
    %c0_120 = arith.constant 0 : index
    %93 = vector.load %arg5[%c0_116, %c0_117, %c3_118, %c0_119, %c0_120] : memref<1x1x4x2x128xf32, #tpu.memory_space<vmem>>, vector<1x1x1x2x128xf32>
    %94 = vector.shape_cast %93 : vector<1x1x1x2x128xf32> to vector<2x128xf32>
    %cst_121 = arith.constant 0.000000e+00 : f32
    %95 = vector.broadcast %cst_121 : f32 to vector<2x128xf32>
    %96 = arith.select %92, %12, %95 : vector<2x128xi1>, vector<2x128xf32>
    %97 = arith.addf %94, %96 : vector<2x128xf32>
    %c0_122 = arith.constant 0 : index
    %c0_123 = arith.constant 0 : index
    %c3_124 = arith.constant 3 : index
    %c0_125 = arith.constant 0 : index
    %c0_126 = arith.constant 0 : index
    %98 = vector.load %arg5[%c0_122, %c0_123, %c3_124, %c0_125, %c0_126] : memref<1x1x4x2x128xf32, #tpu.memory_space<vmem>>, vector<1x1x1x2x128xf32>
    %99 = vector.shape_cast %98 : vector<1x1x1x2x128xf32> to vector<2x128xf32>
    %100 = vector.shape_cast %97 : vector<2x128xf32> to vector<1x1x1x2x128xf32>
    tpu.vector_store %arg5[%c0_122, %c0_123, %c3_124, %c0_125, %c0_126], %100 {strides = array<i32>} : memref<1x1x4x2x128xf32, #tpu.memory_space<vmem>>, vector<1x1x1x2x128xf32>,
    %c0_127 = arith.constant 0 : index
    %c0_128 = arith.constant 0 : index
    %c3_129 = arith.constant 3 : index
    %c0_130 = arith.constant 0 : index
    %c0_131 = arith.constant 0 : index
    %101 = vector.load %arg6[%c0_127, %c0_128, %c3_129, %c0_130, %c0_131] : memref<1x1x4x2x128xf32, #tpu.memory_space<vmem>>, vector<1x1x1x2x128xf32>
    %102 = vector.shape_cast %101 : vector<1x1x1x2x128xf32> to vector<2x128xf32>
    %cst_132 = arith.constant 1.000000e+00 : f32
    %cst_133 = arith.constant 0.000000e+00 : f32
    %103 = vector.broadcast %cst_132 : f32 to vector<2x128xf32>
    %104 = vector.broadcast %cst_133 : f32 to vector<2x128xf32>
    %105 = arith.select %92, %103, %104 : vector<2x128xi1>, vector<2x128xf32>
    %106 = arith.addf %102, %105 : vector<2x128xf32>
    %c0_134 = arith.constant 0 : index
    %c0_135 = arith.constant 0 : index
    %c3_136 = arith.constant 3 : index
    %c0_137 = arith.constant 0 : index
    %c0_138 = arith.constant 0 : index
    %107 = vector.load %arg6[%c0_134, %c0_135, %c3_136, %c0_137, %c0_138] : memref<1x1x4x2x128xf32, #tpu.memory_space<vmem>>, vector<1x1x1x2x128xf32>
    %108 = vector.shape_cast %107 : vector<1x1x1x2x128xf32> to vector<2x128xf32>
    %109 = vector.shape_cast %106 : vector<2x128xf32> to vector<1x1x1x2x128xf32>
    tpu.vector_store %arg6[%c0_134, %c0_135, %c3_136, %c0_137, %c0_138], %109 {strides = array<i32>} : memref<1x1x4x2x128xf32, #tpu.memory_space<vmem>>, vector<1x1x1x2x128xf32>,
    %c0_139 = arith.constant 0 : index
    %c0_140 = arith.constant 0 : index
    %c3_141 = arith.constant 3 : index
    %c0_142 = arith.constant 0 : index
    %c0_143 = arith.constant 0 : index
    %110 = vector.load %arg7[%c0_139, %c0_140, %c3_141, %c0_142, %c0_143] : memref<1x1x4x2x128xf32, #tpu.memory_space<vmem>>, vector<1x1x1x2x128xf32>
    %111 = vector.shape_cast %110 : vector<1x1x1x2x128xf32> to vector<2x128xf32>
    %112 = arith.mulf %12, %12 : vector<2x128xf32>
    %113 = arith.addf %111, %112 : vector<2x128xf32>
    %c0_144 = arith.constant 0 : index
    %c0_145 = arith.constant 0 : index
    %c3_146 = arith.constant 3 : index
    %c0_147 = arith.constant 0 : index
    %c0_148 = arith.constant 0 : index
    %114 = vector.load %arg7[%c0_144, %c0_145, %c3_146, %c0_147, %c0_148] : memref<1x1x4x2x128xf32, #tpu.memory_space<vmem>>, vector<1x1x1x2x128xf32>
    %115 = vector.shape_cast %114 : vector<1x1x1x2x128xf32> to vector<2x128xf32>
    %116 = vector.shape_cast %113 : vector<2x128xf32> to vector<1x1x1x2x128xf32>
    tpu.vector_store %arg7[%c0_144, %c0_145, %c3_146, %c0_147, %c0_148], %116 {strides = array<i32>} : memref<1x1x4x2x128xf32, #tpu.memory_space<vmem>>, vector<1x1x1x2x128xf32>,
    return
  }
  func.func @transform_0(%arg0: i32, %arg1: i32, %arg2: i32) -> (i32, i32, i32, i32) {
    %c1_i32 = arith.constant 1 : i32
    %0 = arith.muli %arg1, %c1_i32 : i32
    %1 = arith.addi %0, %arg2 : i32
    %c0_i32 = arith.constant 0 : i32
    %2 = arith.minsi %1, %c0_i32 : i32
    %c0_i32_0 = arith.constant 0 : i32
    %c0_i32_1 = arith.constant 0 : i32
    %c0_i32_2 = arith.constant 0 : i32
    return %arg0, %c0_i32_0, %2, %c0_i32_1 : i32, i32, i32, i32
  }
  func.func @transform_1(%arg0: i32, %arg1: i32, %arg2: i32) -> (i32, i32, i32, i32) {
    %c1_i32 = arith.constant 1 : i32
    %0 = arith.muli %arg1, %c1_i32 : i32
    %1 = arith.addi %0, %arg2 : i32
    %c0_i32 = arith.constant 0 : i32
    %2 = arith.minsi %1, %c0_i32 : i32
    %c0_i32_0 = arith.constant 0 : i32
    %c0_i32_1 = arith.constant 0 : i32
    %c0_i32_2 = arith.constant 0 : i32
    return %arg0, %c0_i32_0, %2, %c0_i32_1 : i32, i32, i32, i32
  }
  func.func @transform_2(%arg0: i32, %arg1: i32, %arg2: i32) -> (i32, i32, i32, i32, i32) {
    %c0_i32 = arith.constant 0 : i32
    %c0_i32_0 = arith.constant 0 : i32
    %c0_i32_1 = arith.constant 0 : i32
    %c0_i32_2 = arith.constant 0 : i32
    return %arg0, %arg1, %c0_i32, %c0_i32_0, %c0_i32_1 : i32, i32, i32, i32, i32
  }
  func.func @transform_3(%arg0: i32, %arg1: i32, %arg2: i32) -> (i32, i32, i32, i32, i32) {
    %c0_i32 = arith.constant 0 : i32
    %c0_i32_0 = arith.constant 0 : i32
    %c0_i32_1 = arith.constant 0 : i32
    %c0_i32_2 = arith.constant 0 : i32
    return %arg0, %arg1, %c0_i32, %c0_i32_0, %c0_i32_1 : i32, i32, i32, i32, i32
  }
  func.func @transform_4(%arg0: i32, %arg1: i32, %arg2: i32) -> (i32, i32, i32, i32, i32) {
    %c0_i32 = arith.constant 0 : i32
    %c0_i32_0 = arith.constant 0 : i32
    %c0_i32_1 = arith.constant 0 : i32
    %c0_i32_2 = arith.constant 0 : i32
    return %arg0, %arg1, %c0_i32, %c0_i32_0, %c0_i32_1 : i32, i32, i32, i32, i32
  }
}

</mosaic_0001>

<llo_original>
// kernel: tpu_custom_call.1
$region0: #{tpu_custom_call.1}
  #allocation0 [shape = 'u32[]', space=smem, size = 0x4, offset = 0x4, fixed_abs, tag = 'smem constant byte address 0x4 - core index']
  #allocation1 [shape = 'u32[72,128]{1,0:T(1,128)}', space=vmem, size = 0x9000, scoped, tag = 'internal scratch']
  %s0 = inlined_call_operand.hbm [shape: f32[2,4,2,128], index: 0, kind: input, shape index: {}]
  %s1 = inlined_call_operand.hbm [shape: s32[2,1,2,128], index: 1, kind: input, shape index: {}]
  %s2 = inlined_call_operand.hbm [shape: f32[2,1,4,2,128], index: 2, kind: output, shape index: {0}]
  %s3 = inlined_call_operand.hbm [shape: f32[2,1,4,2,128], index: 3, kind: output, shape index: {1}]
  %s4 = inlined_call_operand.hbm [shape: f32[2,1,4,2,128], index: 4, kind: output, shape index: {2}]
  %5 = xla_tuple %s2, %s3, %s4
  %s6 = sld [smem:[#allocation0]]
  $region69: #{tpu_custom_call.1} parent=0
    _
  %s8 = ssub.s32 1, %s6
  %s9 = scalar_select 0, %s8, %s6
  $region1: #{tpu_custom_call.1} parent=0
    #allocation2 [shape = 'u8[8192]{0}', space=vmem, size = 0x2000, scoped, tag = 'input window, operand 0']
    #allocation3 [shape = 's32[2]{0}', space=sflag, size = 0x8, scoped, tag = 'scoped memory for tpu_custom_call.1']
    #allocation4 [shape = 's32[2]{0}', space=sflag, size = 0x8, scoped, tag = 'scoped memory for tpu_custom_call.1']
    #allocation5 [shape = 'u8[2048]{0}', space=vmem, size = 0x800, scoped, tag = 'input window, operand 1']
    #allocation6 [shape = 's32[2]{0}', space=sflag, size = 0x8, scoped, tag = 'scoped memory for tpu_custom_call.1']
    #allocation7 [shape = 'u8[8192]{0}', space=vmem, size = 0x2000, scoped, tag = 'output window, operand 0']
    #allocation8 [shape = 'u8[8192]{0}', space=vmem, size = 0x2000, scoped, tag = 'output window, operand 1']
    #allocation9 [shape = 's32[2]{0}', space=sflag, size = 0x8, scoped, tag = 'scoped memory for tpu_custom_call.1']
    #allocation10 [shape = 'u8[8192]{0}', space=vmem, size = 0x2000, scoped, tag = 'output window, operand 2']
    %10 = vsyncpa [#allocation3], 0
    %s11 = scalar_lea.sflag [#allocation3], 1
    %12 = vsyncpa %s11, 0
    %13 = vsyncpa [#allocation6], 0
    %s14 = scalar_lea.sflag [#allocation6], 1
    %15 = vsyncpa %s14, 0
    %16 = vsyncpa [#allocation4], 0
    %s17 = scalar_lea.sflag [#allocation4], 1
    %18 = vsyncpa %s17, 0
    %19 = vsyncpa [#allocation9], 0
    %s20 = scalar_lea.sflag [#allocation9], 1
    %21 = vsyncpa %s20, 0
    loop: start=0, step=1, limit=4
    $region2: #{tpu_custom_call.1} parent=1 // loop_pre_header
      _
    $region3: #{tpu_custom_call.1} parent=1 // loop_header
      %s23 = sphi 0, %s27
      %p24 = scmp.ge.s32.totalorder %s23, 4
      %s30 = sphi 0, %s49
      %s31 = sphi 0, %s45
      %s32 = sphi 0, %s41
      %s33 = sphi 0, %s30
      %s34 = sphi 0, %s31
      %s35 = sphi 0, %s32
      %s36 = sphi 0, %s33
      %s37 = sphi 0, %s34
      %s38 = sphi 0, %s35
      %s60 = sphi 0, %s62
      %s63 = sphi 0, %s60
      %s64 = sphi 0, %s63
      %s80 = sphi 0, %s64
      %s94 = sphi 0, %s96
      %s97 = sphi 0, %s94
      %s98 = sphi 0, %s97
      %s114 = sphi 0, %s98
      %s122 = sphi 0, %s124
      %s125 = sphi 0, %s122
      %s126 = sphi 0, %s125
      %s142 = sphi 0, %s126
      %s150 = sphi 0, %s152
      %s153 = sphi 0, %s150
      %s154 = sphi 0, %s153
      %s170 = sphi 0, %s154
      %s178 = sphi 0, %s180
      %s181 = sphi 0, %s178
      %s182 = sphi 0, %s181
      %s198 = sphi 0, %s182
    $region4: #{tpu_custom_call.1} parent=1 // loop_header_branch
      %26 = sbr.rel (%p24) target = $region8
    $region5: #{tpu_custom_call.1} parent=1 // loop_body
      %s28 = ssub.s32 %s23, 1
      %s29 = ssub.s32 %s23, 2
      %s39 = sadd.s32 1, %s32
      %p40 = scmp.ge.s32.totalorder %s39, 1
      %s41 = scalar_select %p40, 0, %s39
      %s42 = sadd.s32 1, %s31
      %s43 = scalar_select %p40, %s42, %s31
      %p44 = scmp.ge.s32.totalorder %s43, 1
      %s45 = scalar_select %p44, 0, %s43
      %s46 = sadd.s32 1, %s30
      %s47 = scalar_select %p44, %s46, %s30
      %p48 = scmp.ge.s32.totalorder %s47, 2
      %s49 = scalar_select %p48, 0, %s47
      %s50 = sadd.s32 %s31, %s32
      %p51 = scmp.lt.s32.totalorder %s50, 0
      %s52 = scalar_select %p51, %s50, 0
      %s53 = sadd.s32 %s45, %s41
      %p54 = scmp.lt.s32.totalorder %s53, 0
      %s55 = scalar_select %p54, %s53, 0
      %s56 = ssub.s32 %s30, %s49
      %s57 = ssub.s32 %s52, %s55
      %s58 = sor.u32 %s56, %s57
      %p59 = scmp.eq.s32.totalorder %s58, 0
      %s61 = sadd.s32 %s60, 1
      %s62 = scalar_select %p59, %s60, %s61
      %p65 = pneg %p59
      %p66 = scmp.eq.s32.totalorder %s23, 1
      %p67 = por %p65, %p66
      %p68 = scmp.ne.s32.totalorder %s60, %s63
      %p69 = scmp.eq.s32.totalorder %s23, 0
      %p70 = por %p68, %p69
      %p71 = scmp.ne.s32.totalorder %s60, %s63
      %p72 = scmp.eq.s32.totalorder %s28, 1
      %p73 = por %p71, %p72
      %p74 = scmp.ne.s32.totalorder %s63, %s64
      %p75 = scmp.eq.s32.totalorder %s28, 0
      %p76 = por %p74, %p75
      %p77 = scmp.ne.s32.totalorder %s63, %s64
      %p78 = scmp.eq.s32.totalorder %s29, 1
      %p79 = por %p77, %p78
      %p81 = scmp.ne.s32.totalorder %s64, %s80
      %p82 = scmp.eq.s32.totalorder %s29, 0
      %p83 = por %p81, %p82
      %s84 = sadd.s32 %s31, %s32
      %p85 = scmp.lt.s32.totalorder %s84, 0
      %s86 = scalar_select %p85, %s84, 0
      %s87 = sadd.s32 %s45, %s41
      %p88 = scmp.lt.s32.totalorder %s87, 0
      %s89 = scalar_select %p88, %s87, 0
      %s90 = ssub.s32 %s30, %s49
      %s91 = ssub.s32 %s86, %s89
      %s92 = sor.u32 %s90, %s91
      %p93 = scmp.eq.s32.totalorder %s92, 0
      %s95 = sadd.s32 %s94, 1
      %s96 = scalar_select %p93, %s94, %s95
      %p99 = pneg %p93
      %p100 = scmp.eq.s32.totalorder %s23, 1
      %p101 = por %p99, %p100
      %p102 = scmp.ne.s32.totalorder %s94, %s97
      %p103 = scmp.eq.s32.totalorder %s23, 0
      %p104 = por %p102, %p103
      %p105 = scmp.ne.s32.totalorder %s94, %s97
      %p106 = scmp.eq.s32.totalorder %s28, 1
      %p107 = por %p105, %p106
      %p108 = scmp.ne.s32.totalorder %s97, %s98
      %p109 = scmp.eq.s32.totalorder %s28, 0
      %p110 = por %p108, %p109
      %p111 = scmp.ne.s32.totalorder %s97, %s98
      %p112 = scmp.eq.s32.totalorder %s29, 1
      %p113 = por %p111, %p112
      %p115 = scmp.ne.s32.totalorder %s98, %s114
      %p116 = scmp.eq.s32.totalorder %s29, 0
      %p117 = por %p115, %p116
      %s118 = ssub.s32 %s30, %s49
      %s119 = ssub.s32 %s31, %s45
      %s120 = sor.u32 %s118, %s119
      %p121 = scmp.eq.s32.totalorder %s120, 0
      %s123 = sadd.s32 %s122, 1
      %s124 = scalar_select %p121, %s122, %s123
      %p127 = pneg %p121
      %p128 = scmp.eq.s32.totalorder %s23, 1
      %p129 = por %p127, %p128
      %p130 = scmp.ne.s32.totalorder %s122, %s125
      %p131 = scmp.eq.s32.totalorder %s23, 0
      %p132 = por %p130, %p131
      %p133 = scmp.ne.s32.totalorder %s122, %s125
      %p134 = scmp.eq.s32.totalorder %s28, 1
      %p135 = por %p133, %p134
      %p136 = scmp.ne.s32.totalorder %s125, %s126
      %p137 = scmp.eq.s32.totalorder %s28, 0
      %p138 = por %p136, %p137
      %p139 = scmp.ne.s32.totalorder %s125, %s126
      %p140 = scmp.eq.s32.totalorder %s29, 1
      %p141 = por %p139, %p140
      %p143 = scmp.ne.s32.totalorder %s126, %s142
      %p144 = scmp.eq.s32.totalorder %s29, 0
      %p145 = por %p143, %p144
      %s146 = ssub.s32 %s30, %s49
      %s147 = ssub.s32 %s31, %s45
      %s148 = sor.u32 %s146, %s147
      %p149 = scmp.eq.s32.totalorder %s148, 0
      %s151 = sadd.s32 %s150, 1
      %s152 = scalar_select %p149, %s150, %s151
      %p155 = pneg %p149
      %p156 = scmp.eq.s32.totalorder %s23, 1
      %p157 = por %p155, %p156
      %p158 = scmp.ne.s32.totalorder %s150, %s153
      %p159 = scmp.eq.s32.totalorder %s23, 0
      %p160 = por %p158, %p159
      %p161 = scmp.ne.s32.totalorder %s150, %s153
      %p162 = scmp.eq.s32.totalorder %s28, 1
      %p163 = por %p161, %p162
      %p164 = scmp.ne.s32.totalorder %s153, %s154
      %p165 = scmp.eq.s32.totalorder %s28, 0
      %p166 = por %p164, %p165
      %p167 = scmp.ne.s32.totalorder %s153, %s154
      %p168 = scmp.eq.s32.totalorder %s29, 1
      %p169 = por %p167, %p168
      %p171 = scmp.ne.s32.totalorder %s154, %s170
      %p172 = scmp.eq.s32.totalorder %s29, 0
      %p173 = por %p171, %p172
      %s174 = ssub.s32 %s30, %s49
      %s175 = ssub.s32 %s31, %s45
      %s176 = sor.u32 %s174, %s175
      %p177 = scmp.eq.s32.totalorder %s176, 0
      %s179 = sadd.s32 %s178, 1
      %s180 = scalar_select %p177, %s178, %s179
      %p183 = pneg %p177
      %p184 = scmp.eq.s32.totalorder %s23, 1
      %p185 = por %p183, %p184
      %p186 = scmp.ne.s32.totalorder %s178, %s181
      %p187 = scmp.eq.s32.totalorder %s23, 0
      %p188 = por %p186, %p187
      %p189 = scmp.ne.s32.totalorder %s178, %s181
      %p190 = scmp.eq.s32.totalorder %s28, 1
      %p191 = por %p189, %p190
      %p192 = scmp.ne.s32.totalorder %s181, %s182
      %p193 = scmp.eq.s32.totalorder %s28, 0
      %p194 = por %p192, %p193
      %p195 = scmp.ne.s32.totalorder %s181, %s182
      %p196 = scmp.eq.s32.totalorder %s29, 1
      %p197 = por %p195, %p196
      %p199 = scmp.ne.s32.totalorder %s182, %s198
      %p200 = scmp.eq.s32.totalorder %s29, 0
      %p201 = por %p199, %p200
      %p202 = scmp.le.s32.totalorder 1, %s23
      %p203 = scmp.lt.s32.totalorder %s23, 3
      %p204 = pnand %p202, %p203
      %p205 = pneg %p204
      // Predicated region
      $region9: #{tpu_custom_call.1} parent=5 // pred_check
        _
      $region10: #{tpu_custom_call.1} parent=5 // pred_check_branch
        %207 = sbr.rel (%p204) target = $region12
      $region11: #{tpu_custom_call.1} parent=5 // pred_region
        %s208 = ssub.s32 %s23, 1
      $region12: #{tpu_custom_call.1} parent=5 // pred_fallthru
        _
      %p209 = scmp.lt.s32.totalorder %s23, 2
      // Predicated region
      $region13: #{tpu_custom_call.1} parent=5 // pred_check
        %p210 = pneg %p209
      $region14: #{tpu_custom_call.1} parent=5 // pred_check_branch
        %212 = sbr.rel (%p210) target = $region16
      $region15: #{tpu_custom_call.1} parent=5 // pred_region
        // Predicated region
        $region17: #{tpu_custom_call.1} parent=15 // pred_check
          %p213 = pneg %p70
        $region18: #{tpu_custom_call.1} parent=15 // pred_check_branch
          %215 = sbr.rel (%p213) target = $region20
        $region19: #{tpu_custom_call.1} parent=15 // pred_region
          %s216 = sand.u32 %s60, 1
          %s217 = scalar_lea.sflag [#allocation3], %s216
          %s218 = sand.u32 %s60, 1
          %s219 = smul.addr %s218, 8
          %s220 = scalar_lea.vmem [#allocation2], %s219
          %s221 = sadd.s32 %s31, %s32
          %p222 = scmp.lt.s32.totalorder %s221, 0
          %s223 = scalar_select %p222, %s221, 0
          %225 = vsyncadd %s217, 0
          %s226 = smul.addr %s30, 4
          %s227 = sadd.s32 %s223, %s226
          %s228 = smul.addr %s227, 2
          %s229 = scalar_lea.hbm %s0, %s228
          %s230 = sshll.u32 %s229, 4
          %s231 = int_to_ptr.hbm [resolvable:$true] %s230
          %s232 = sshll.u32 %s220, 4
          %s233 = int_to_ptr.vmem [resolvable:$true] %s232
          %238 = dma.hbm_to_vmem [thread:$0]  %s231, 128, %s233, %s217, 32, 32, 2
        $region20: #{tpu_custom_call.1} parent=15 // pred_fallthru
          _
        // Predicated region
        $region21: #{tpu_custom_call.1} parent=15 // pred_check
          %p239 = pneg %p104
        $region22: #{tpu_custom_call.1} parent=15 // pred_check_branch
          %241 = sbr.rel (%p239) target = $region24
        $region23: #{tpu_custom_call.1} parent=15 // pred_region
          %s242 = sand.u32 %s94, 1
          %s243 = scalar_lea.sflag [#allocation6], %s242
          %s244 = sand.u32 %s94, 1
          %s245 = smul.addr %s244, 2
          %s246 = scalar_lea.vmem [#allocation5], %s245
          %s247 = sadd.s32 %s31, %s32
          %p248 = scmp.lt.s32.totalorder %s247, 0
          %s249 = scalar_select %p248, %s247, 0
          %251 = vsyncadd %s243, 0
          %s252 = sadd.s32 %s249, %s30
          %s253 = smul.addr %s252, 2
          %s254 = scalar_lea.hbm %s1, %s253
          %s256 = sshll.u32 %s254, 4
          %s257 = int_to_ptr.hbm [resolvable:$true] %s256
          %s258 = sshll.u32 %s246, 4
          %s259 = int_to_ptr.vmem [resolvable:$true] %s258
          %261 = dma.hbm_to_vmem [thread:$0]  %s257, 32, %s259, %s243
        $region24: #{tpu_custom_call.1} parent=15 // pred_fallthru
          _
      $region16: #{tpu_custom_call.1} parent=5 // pred_fallthru
        _
      %p262 = scmp.le.s32.totalorder 1, %s23
      %p263 = scmp.lt.s32.totalorder %s23, 3
      %p264 = pnand %p262, %p263
      %p265 = pneg %p264
      // Predicated region
      $region25: #{tpu_custom_call.1} parent=5 // pred_check
        _
      $region26: #{tpu_custom_call.1} parent=5 // pred_check_branch
        %267 = sbr.rel (%p264) target = $region28
      $region27: #{tpu_custom_call.1} parent=5 // pred_region
        %s268 = ssub.s32 %s23, 1
        %s269 = sand.u32 %s63, 1
        %s270 = scalar_lea.sflag [#allocation3], %s269
        %s271 = sand.u32 %s63, 1
        %s272 = smul.addr %s271, 8
        %s273 = scalar_lea.vmem [#allocation2], %s272
        // Predicated region
        $region29: #{tpu_custom_call.1} parent=27 // pred_check
          %p274 = pneg %p76
        $region30: #{tpu_custom_call.1} parent=27 // pred_check_branch
          %276 = sbr.rel (%p274) target = $region32
        $region31: #{tpu_custom_call.1} parent=27 // pred_region
          %278 = dma.done %s270, 128
        $region32: #{tpu_custom_call.1} parent=27 // pred_fallthru
          _
        %s279 = sand.u32 %s97, 1
        %s280 = scalar_lea.sflag [#allocation6], %s279
        %s281 = sand.u32 %s97, 1
        %s282 = smul.addr %s281, 2
        %s283 = scalar_lea.vmem [#allocation5], %s282
        // Predicated region
        $region33: #{tpu_custom_call.1} parent=27 // pred_check
          %p284 = pneg %p110
        $region34: #{tpu_custom_call.1} parent=27 // pred_check_branch
          %286 = sbr.rel (%p284) target = $region36
        $region35: #{tpu_custom_call.1} parent=27 // pred_region
          %288 = dma.done %s280, 32
        $region36: #{tpu_custom_call.1} parent=27 // pred_fallthru
          _
        %s289 = sand.u32 %s63, 1
        %s290 = scalar_lea.sflag [#allocation3], %s289
        %s291 = sand.u32 %s63, 1
        %s292 = smul.addr %s291, 8
        %s293 = scalar_lea.vmem [#allocation2], %s292
        %p294 = pneg %p76
        %p295 = pneg %p73
        %s296 = sand.u32 %s97, 1
        %s297 = scalar_lea.sflag [#allocation6], %s296
        %s298 = sand.u32 %s97, 1
        %s299 = smul.addr %s298, 2
        %s300 = scalar_lea.vmem [#allocation5], %s299
        %p301 = pneg %p110
        %p302 = pneg %p107
        %p303 = pneg %p138
        %p304 = pneg %p135
        %s305 = sand.u32 %s125, 1
        %s306 = scalar_lea.sflag [#allocation4], %s305
        %s307 = sand.u32 %s125, 1
        %s308 = smul.addr %s307, 8
        %s309 = scalar_lea.vmem [#allocation7], %s308
        %p310 = pneg %p166
        %p311 = pneg %p163
        %s312 = sand.u32 %s28, 1
        %s313 = scalar_lea.sflag [#allocation9], %s312
        %s314 = sand.u32 %s153, 1
        %s315 = smul.addr %s314, 8
        %s316 = scalar_lea.vmem [#allocation8], %s315
        %p317 = pneg %p194
        %p318 = pneg %p191
        %s319 = sand.u32 %s28, 1
        %s320 = scalar_lea.sflag [#allocation9], %s319
        %s321 = sand.u32 %s181, 1
        %s322 = smul.addr %s321, 8
        %s323 = scalar_lea.vmem [#allocation10], %s322
        %s324 = sadd.s32 %s34, %s35
        %p325 = scmp.lt.s32.totalorder %s324, 0
        %s326 = scalar_select %p325, %s324, 0
        %s327 = sadd.s32 %s34, %s35
        %p328 = scmp.lt.s32.totalorder %s327, 0
        %s329 = scalar_select %p328, %s327, 0
        %p330 = scmp.eq.s32.totalorder %s35, 0
        // Predicated region
        $region37: #{tpu_custom_call.1} parent=27 // pred_check
          %p331 = pneg %p330
        $region38: #{tpu_custom_call.1} parent=27 // pred_check_branch
          %333 = sbr.rel (%p331) target = $region40
        $region39: #{tpu_custom_call.1} parent=27 // pred_region
          %334 = vst [vmem:[%s309] sm:$0x3] 0.0
          %335 = vst [vmem:[%s309 + $0x2] sm:$0x3] 0.0
          %336 = vst [vmem:[%s309 + $0x4] sm:$0x3] 0.0
          %337 = vst [vmem:[%s309 + $0x6] sm:$0x3] 0.0
          %338 = vst [vmem:[%s316] sm:$0x3] 0.0
          %339 = vst [vmem:[%s316 + $0x2] sm:$0x3] 0.0
          %340 = vst [vmem:[%s316 + $0x4] sm:$0x3] 0.0
          %341 = vst [vmem:[%s316 + $0x6] sm:$0x3] 0.0
          %342 = vst [vmem:[%s323] sm:$0x3] 0.0
          %343 = vst [vmem:[%s323 + $0x2] sm:$0x3] 0.0
          %344 = vst [vmem:[%s323 + $0x4] sm:$0x3] 0.0
          %345 = vst [vmem:[%s323 + $0x6] sm:$0x3] 0.0
        $region40: #{tpu_custom_call.1} parent=27 // pred_fallthru
          _
        %v346 = vld [vmem:[%s283] sm:$0x3]
        %v347 = vld [vmem:[%s273] sm:$0x3]
        %s348 = scalar_lea.vmem %s273, 2 [#allocation2]
        %v349 = vld [vmem:[%s348] sm:$0x3]
        %s350 = scalar_lea.vmem %s273, 4 [#allocation2]
        %v351 = vld [vmem:[%s350] sm:$0x3]
        %s352 = scalar_lea.vmem %s273, 6 [#allocation2]
        %v353 = vld [vmem:[%s352] sm:$0x3]
        %vm354 = vcmp.eq.s32.totalorder %v346, 0
        %v355 = vld [vmem:[%s309] sm:$0x3]
        %v356 = vsel %vm354, %v347, 0.0
        %v357 = vadd.f32 %v355, %v356
        %358 = vst [vmem:[%s309] sm:$0x3] %v357
        %v359 = vld [vmem:[%s316] sm:$0x3]
        %v360 = vsel %vm354, 1.0, 0.0
        %v361 = vadd.f32 %v359, %v360
        %362 = vst [vmem:[%s316] sm:$0x3] %v361
        %v363 = vld [vmem:[%s323] sm:$0x3]
        %v364 = vmul.f32 %v347, %v347
        %v365 = vadd.f32 %v363, %v364
        %366 = vst [vmem:[%s323] sm:$0x3] %v365
        %vm367 = vcmp.eq.s32.totalorder %v346, 1
        %s368 = scalar_lea.vmem %s309, 2 [#allocation7]
        %v369 = vld [vmem:[%s368] sm:$0x3]
        %v370 = vsel %vm367, %v349, 0.0
        %v371 = vadd.f32 %v369, %v370
        %372 = vst [vmem:[%s368] sm:$0x3] %v371
        %s373 = scalar_lea.vmem %s316, 2 [#allocation8]
        %v374 = vld [vmem:[%s373] sm:$0x3]
        %v375 = vsel %vm367, 1.0, 0.0
        %v376 = vadd.f32 %v374, %v375
        %377 = vst [vmem:[%s373] sm:$0x3] %v376
        %s378 = scalar_lea.vmem %s323, 2 [#allocation10]
        %v379 = vld [vmem:[%s378] sm:$0x3]
        %v380 = vmul.f32 %v349, %v349
        %v381 = vadd.f32 %v379, %v380
        %382 = vst [vmem:[%s378] sm:$0x3] %v381
        %vm383 = vcmp.eq.s32.totalorder %v346, 2
        %s384 = scalar_lea.vmem %s309, 4 [#allocation7]
        %v385 = vld [vmem:[%s384] sm:$0x3]
        %v386 = vsel %vm383, %v351, 0.0
        %v387 = vadd.f32 %v385, %v386
        %388 = vst [vmem:[%s384] sm:$0x3] %v387
        %s389 = scalar_lea.vmem %s316, 4 [#allocation8]
        %v390 = vld [vmem:[%s389] sm:$0x3]
        %v391 = vsel %vm383, 1.0, 0.0
        %v392 = vadd.f32 %v390, %v391
        %393 = vst [vmem:[%s389] sm:$0x3] %v392
        %s394 = scalar_lea.vmem %s323, 4 [#allocation10]
        %v395 = vld [vmem:[%s394] sm:$0x3]
        %v396 = vmul.f32 %v351, %v351
        %v397 = vadd.f32 %v395, %v396
        %398 = vst [vmem:[%s394] sm:$0x3] %v397
        %vm399 = vcmp.eq.s32.totalorder %v346, 3
        %s400 = scalar_lea.vmem %s309, 6 [#allocation7]
        %v401 = vld [vmem:[%s400] sm:$0x3]
        %v402 = vsel %vm399, %v353, 0.0
        %v403 = vadd.f32 %v401, %v402
        %404 = vst [vmem:[%s400] sm:$0x3] %v403
        %s405 = scalar_lea.vmem %s316, 6 [#allocation8]
        %v406 = vld [vmem:[%s405] sm:$0x3]
        %v407 = vsel %vm399, 1.0, 0.0
        %v408 = vadd.f32 %v406, %v407
        %409 = vst [vmem:[%s405] sm:$0x3] %v408
        %s410 = scalar_lea.vmem %s323, 6 [#allocation10]
        %v411 = vld [vmem:[%s410] sm:$0x3]
        %v412 = vmul.f32 %v353, %v353
        %v413 = vadd.f32 %v411, %v412
        %414 = vst [vmem:[%s410] sm:$0x3] %v413
        %s415 = sand.u32 %s125, 1
        %s416 = scalar_lea.sflag [#allocation4], %s415
        %s417 = sand.u32 %s125, 1
        %s418 = smul.addr %s417, 8
        %s419 = scalar_lea.vmem [#allocation7], %s418
        %s420 = sand.u32 %s28, 1
        %s421 = scalar_lea.sflag [#allocation9], %s420
        %s422 = sand.u32 %s153, 1
        %s423 = smul.addr %s422, 8
        %s424 = scalar_lea.vmem [#allocation8], %s423
        %s425 = sand.u32 %s28, 1
        %s426 = scalar_lea.sflag [#allocation9], %s425
        %s427 = sand.u32 %s181, 1
        %s428 = smul.addr %s427, 8
        %s429 = scalar_lea.vmem [#allocation10], %s428
        // Predicated region
        $region41: #{tpu_custom_call.1} parent=27 // pred_check
          %p430 = pneg %p135
        $region42: #{tpu_custom_call.1} parent=27 // pred_check_branch
          %432 = sbr.rel (%p430) target = $region44
        $region43: #{tpu_custom_call.1} parent=27 // pred_region
          %434 = vsyncadd %s416, 0
          %s435 = smul.addr %s34, 4
          %s436 = smul.addr %s33, 4
          %s437 = sadd.s32 %s435, %s436
          %s438 = smul.addr %s437, 2
          %s439 = scalar_lea.hbm %s2, %s438
          %s440 = sshll.u32 %s419, 4
          %s441 = int_to_ptr.vmem [resolvable:$true] %s440
          %s442 = sshll.u32 %s439, 4
          %s443 = int_to_ptr.hbm [resolvable:$true] %s442
          %448 = dma.vmem_to_hbm [thread:$0]  %s441, 128, %s443, %s416, 32, 32, 2
        $region44: #{tpu_custom_call.1} parent=27 // pred_fallthru
          _
        // Predicated region
        $region45: #{tpu_custom_call.1} parent=27 // pred_check
          %p449 = pneg %p163
        $region46: #{tpu_custom_call.1} parent=27 // pred_check_branch
          %451 = sbr.rel (%p449) target = $region48
        $region47: #{tpu_custom_call.1} parent=27 // pred_region
          %453 = vsyncadd %s421, 0
          %s454 = smul.addr %s34, 4
          %s455 = smul.addr %s33, 4
          %s456 = sadd.s32 %s454, %s455
          %s457 = smul.addr %s456, 2
          %s458 = scalar_lea.hbm %s3, %s457
          %s459 = sshll.u32 %s424, 4
          %s460 = int_to_ptr.vmem [resolvable:$true] %s459
          %s461 = sshll.u32 %s458, 4
          %s462 = int_to_ptr.hbm [resolvable:$true] %s461
          %467 = dma.vmem_to_hbm [thread:$0]  %s460, 128, %s462, %s421, 32, 32, 2
        $region48: #{tpu_custom_call.1} parent=27 // pred_fallthru
          _
        // Predicated region
        $region49: #{tpu_custom_call.1} parent=27 // pred_check
          %p468 = pneg %p191
        $region50: #{tpu_custom_call.1} parent=27 // pred_check_branch
          %470 = sbr.rel (%p468) target = $region52
        $region51: #{tpu_custom_call.1} parent=27 // pred_region
          %472 = vsyncadd %s426, 0
          %s473 = smul.addr %s34, 4
          %s474 = smul.addr %s33, 4
          %s475 = sadd.s32 %s473, %s474
          %s476 = smul.addr %s475, 2
          %s477 = scalar_lea.hbm %s4, %s476
          %s478 = sshll.u32 %s429, 4
          %s479 = int_to_ptr.vmem [resolvable:$true] %s478
          %s480 = sshll.u32 %s477, 4
          %s481 = int_to_ptr.hbm [resolvable:$true] %s480
          %486 = dma.vmem_to_hbm [thread:$0]  %s479, 128, %s481, %s426, 32, 32, 2
        $region52: #{tpu_custom_call.1} parent=27 // pred_fallthru
          _
      $region28: #{tpu_custom_call.1} parent=5 // pred_fallthru
        _
      %p487 = scmp.le.s32.totalorder 2, %s23
      // Predicated region
      $region53: #{tpu_custom_call.1} parent=5 // pred_check
        %p488 = pneg %p487
      $region54: #{tpu_custom_call.1} parent=5 // pred_check_branch
        %490 = sbr.rel (%p488) target = $region56
      $region55: #{tpu_custom_call.1} parent=5 // pred_region
        %s491 = ssub.s32 %s23, 2
        // Predicated region
        $region57: #{tpu_custom_call.1} parent=55 // pred_check
          %p492 = pneg %p141
        $region58: #{tpu_custom_call.1} parent=55 // pred_check_branch
          %494 = sbr.rel (%p492) target = $region60
        $region59: #{tpu_custom_call.1} parent=55 // pred_region
          %s495 = sand.u32 %s126, 1
          %s496 = scalar_lea.sflag [#allocation4], %s495
          %s497 = sand.u32 %s126, 1
          %s498 = smul.addr %s497, 8
          %s499 = scalar_lea.vmem [#allocation7], %s498
          %501 = dma.done %s496, 128
        $region60: #{tpu_custom_call.1} parent=55 // pred_fallthru
          _
        // Predicated region
        $region61: #{tpu_custom_call.1} parent=55 // pred_check
          %p502 = pneg %p169
        $region62: #{tpu_custom_call.1} parent=55 // pred_check_branch
          %504 = sbr.rel (%p502) target = $region64
        $region63: #{tpu_custom_call.1} parent=55 // pred_region
          %s505 = sand.u32 %s29, 1
          %s506 = scalar_lea.sflag [#allocation9], %s505
          %s507 = sand.u32 %s154, 1
          %s508 = smul.addr %s507, 8
          %s509 = scalar_lea.vmem [#allocation8], %s508
          %511 = dma.done %s506, 128
        $region64: #{tpu_custom_call.1} parent=55 // pred_fallthru
          _
        // Predicated region
        $region65: #{tpu_custom_call.1} parent=55 // pred_check
          %p512 = pneg %p197
        $region66: #{tpu_custom_call.1} parent=55 // pred_check_branch
          %514 = sbr.rel (%p512) target = $region68
        $region67: #{tpu_custom_call.1} parent=55 // pred_region
          %s515 = sand.u32 %s29, 1
          %s516 = scalar_lea.sflag [#allocation9], %s515
          %s517 = sand.u32 %s182, 1
          %s518 = smul.addr %s517, 8
          %s519 = scalar_lea.vmem [#allocation10], %s518
          %521 = dma.done %s516, 128
        $region68: #{tpu_custom_call.1} parent=55 // pred_fallthru
          _
      $region56: #{tpu_custom_call.1} parent=5 // pred_fallthru
        _
    $region6: #{tpu_custom_call.1} parent=1 // loop_footer
      %s27 = sadd.s32 1, %s23
    $region7: #{tpu_custom_call.1} parent=1 // loop_footer_branch
      %22 = sbr.rel target = $region3
    $region8: #{tpu_custom_call.1} parent=1 // loop_exit
      _
    %522 = vsyncpa [#allocation3], 1
    %s523 = scalar_lea.sflag [#allocation3], 1
    %524 = vsyncpa %s523, 1
    %525 = vsyncpa [#allocation6], 1
    %s526 = scalar_lea.sflag [#allocation6], 1
    %527 = vsyncpa %s526, 1
    %528 = vsyncpa [#allocation4], 1
    %s529 = scalar_lea.sflag [#allocation4], 1
    %530 = vsyncpa %s529, 1
    %531 = vsyncpa [#allocation9], 1
    %s532 = scalar_lea.sflag [#allocation9], 1
    %533 = vsyncpa %s532, 1

</llo_original>
